<compile_context>
chip_gen: v5e
topology: v5e:2x2
jax: 0.10.0
libtpu: 0.0.40
codegen_flags: <defaults>
</compile_context>

<pallas_src>
import math

import jax
import jax.numpy as jnp
from jax.experimental import pallas as pl
from jax.experimental.pallas import tpu as pltpu


# ---------------------------------------------------------------------------
# In-kernel math.
# ---------------------------------------------------------------------------
def _channel_scale(pooled, w_ref):
    """(sigmoid(conv1d_k(pooled)) + 1) for a (Bt, C) f32 `pooled`; taps in SMEM."""
    bt, c = pooled.shape
    k = w_ref.shape[0]
    pad = (k - 1) // 2

    if c % 128 == 0:
        # Lane-aligned channels: k static lane rotations (XLU slot, ~free) plus
        # an iota validity mask emulate the zero-padded cross-correlation.
        ch = jax.lax.broadcasted_iota(jnp.int32, (bt, c), 1)
        conv = jnp.zeros((bt, c), jnp.float32)
        for s in range(k):                          # k is small and static
            d = s - pad
            shifted = pooled if d == 0 else pltpu.roll(pooled, (-d) % c, 1)
            valid = (ch + d >= 0) & (ch + d < c)
            conv = conv + w_ref[s] * jnp.where(valid, shifted, 0.0)
    else:
        # Small / non-lane-aligned C: build the banded (C, C) tap matrix from
        # iota in-kernel (never in HBM) and contract with a VPU
        # broadcast-multiply-reduce.  Exact f32, no MXU matvec, no lane-rotate
        # alignment constraints.  Temps <= Bt*C*C*4 bytes (tiny for ECA's Cs).
        # TODO(synk): a huge C that is not a multiple of 128 would make this
        # temp large; such shapes do not occur in ECA host networks.
        row = jax.lax.broadcasted_iota(jnp.int32, (c, c), 0)
        col = jax.lax.broadcasted_iota(jnp.int32, (c, c), 1)
        band = row - col + pad                       # == tap index s when in band
        taps = jnp.zeros((c, c), jnp.float32)
        for s in range(k):
            taps = taps + jnp.where(band == s, w_ref[s], 0.0)
        conv = jnp.sum(pooled[:, :, None] * taps[None, :, :], axis=1)

    return jax.nn.sigmoid(conv) + 1.0


def _eca_fused_kernel(x_ref, w_ref, o_ref):
    """Single-pass ECA on one (Bt, C, HW) block: pool -> conv -> modulate."""
    bt, c, hw = x_ref.shape
    # Reduction read for the pool; do NOT keep the whole block live as a value
    # across the pool -> conv -> scale chain.
    pooled = jnp.sum(x_ref[...], axis=-1, dtype=jnp.float32) * (1.0 / hw)   # (Bt, C)
    scale = _channel_scale(pooled, w_ref).astype(o_ref.dtype)[:, :, None]   # (Bt, C, 1)
    # out = x * sigmoid(conv) + x == x * (sigmoid(conv) + 1); second read of x.
    o_ref[...] = (x_ref[...] * scale).astype(o_ref.dtype)


def _eca_pool_kernel(x_ref, acc_ref):
    """Fallback pass 1: spatial-sum accumulator over the HW grid axis."""
    @pl.when(pl.program_id(1) == 0)
    def _():
        acc_ref[...] = jnp.zeros_like(acc_ref)
    acc_ref[...] += jnp.sum(x_ref[...], axis=-1, keepdims=True, dtype=jnp.float32)


def _eca_scale_kernel(x_ref, s_ref, o_ref):
    """Fallback pass 2: out = x * (sigmoid(conv) + 1) with a precomputed scale."""
    o_ref[...] = (x_ref[...] * s_ref[...]).astype(o_ref.dtype)


# ---------------------------------------------------------------------------
# Tiling / budget helpers.
# ---------------------------------------------------------------------------
def _vmem_capacity_bytes():
    try:
        cap = int(pltpu.get_tpu_info().vmem_capacity_bytes)
        if cap > 0:
            return cap
    except Exception:         # off-TPU / older runtime: assume smallest (v7x)
        pass
    return 64 << 20


def _budgets(max_block_bytes):
    vmem_cap = _vmem_capacity_bytes()
    if vmem_cap >= (96 << 20):        # v5e / v6e class: 128 MiB physical VMEM
        target, limit_cap = 12 << 20, 96 << 20
    else:                             # v7x class: 64 MiB physical VMEM
        target, limit_cap = 6 << 20, 44 << 20
    if max_block_bytes is not None:
        target = int(max_block_bytes)
    return target, limit_cap


def _vmem_limit(buffered_bytes, limit_cap):
    return int(min(limit_cap, max(16 << 20, buffered_bytes + (2 << 20))))


def _pick_batch_tile(batch, per_sample_bytes, target_bytes):
    """Largest batch tile whose block fits the target; only split further for
    the second TensorCore when blocks stay at/above ~half the target."""
    bt = int(min(batch, max(1, target_bytes // max(per_sample_bytes, 1))))
    while batch % bt:
        bt -= 1
    if bt == batch and batch > 1:
        half = batch // 2
        while batch % half:
            half -= 1
        if half * per_sample_bytes >= target_bytes // 2:
            bt = half
    return bt


def _pick_spatial_tile(hw, c, itemsize, target_bytes):
    """Largest divisor of HW whose (1, C, St) block fits the target; prefer
    lane-aligned (St % 128 == 0) tiles to keep DMAs and stores dense."""
    max_st = int(max(1, target_bytes // max(c * itemsize, 1)))
    if max_st >= hw:
        return hw
    best_any, best_aligned = 1, 0
    for d in range(1, max_st + 1):
        if hw % d == 0:
            best_any = d
            if d % 128 == 0:
                best_aligned = d
    return best_aligned if best_aligned else best_any


# ---------------------------------------------------------------------------
# pallas_call wrappers.
# ---------------------------------------------------------------------------
def _eca_fused(x_flat, w, target_bytes, limit_cap):
    B, C, HW = x_flat.shape
    itemsize = x_flat.dtype.itemsize
    per_sample_bytes = C * HW * itemsize
    Bt = _pick_batch_tile(B, per_sample_bytes, target_bytes)
    block_bytes = Bt * per_sample_bytes

    return pl.pallas_call(
        _eca_fused_kernel,
        out_shape=jax.ShapeDtypeStruct((B, C, HW), x_flat.dtype),
        grid_spec=pltpu.PrefetchScalarGridSpec(
            num_scalar_prefetch=0,
            grid=(B // Bt,),
            in_specs=[
                pl.BlockSpec((Bt, C, HW), lambda b: (b, 0, 0)),
                pl.BlockSpec(memory_space=pltpu.MemorySpace.SMEM),   # conv taps
            ],
            out_specs=pl.BlockSpec((Bt, C, HW), lambda b: (b, 0, 0)),
        ),
        compiler_params=pltpu.CompilerParams(
            dimension_semantics=("parallel",),
            # in + out blocks are each double-buffered -> 4x block + headroom.
            vmem_limit_bytes=_vmem_limit(4 * block_bytes, limit_cap)),
        cost_estimate=pl.CostEstimate(
            flops=3 * B * C * HW,
            transcendentals=B * C,
            bytes_accessed=2 * B * C * HW * itemsize),
    )(x_flat, w)


def _eca_spatially_tiled(x_flat, w, target_bytes, limit_cap):
    B, C, HW = x_flat.shape
    itemsize = x_flat.dtype.itemsize
    St = _pick_spatial_tile(HW, C, itemsize, target_bytes)
    n_hw = HW // St
    block_bytes = C * St * itemsize

    # Pass 1: spatial sums per (batch, channel), f32-accumulated across the HW
    # grid axis ("arbitrary"; the (1, C, 1) output block is revisited).
    pooled_sum = pl.pallas_call(
        _eca_pool_kernel,
        out_shape=jax.ShapeDtypeStruct((B, C, 1), jnp.float32),
        grid_spec=pltpu.PrefetchScalarGridSpec(
            num_scalar_prefetch=0,
            grid=(B, n_hw),
            in_specs=[pl.BlockSpec((1, C, St), lambda b, s: (b, 0, s))],
            out_specs=pl.BlockSpec((1, C, 1), lambda b, s: (b, 0, 0)),
        ),
        compiler_params=pltpu.CompilerParams(
            dimension_semantics=("parallel", "arbitrary"),
            vmem_limit_bytes=_vmem_limit(2 * block_bytes, limit_cap)),
        cost_estimate=pl.CostEstimate(
            flops=B * C * HW, transcendentals=0,
            bytes_accessed=B * C * HW * itemsize + B * C * 4),
    )(x_flat)

    # Tiny (B, C) channel conv + sigmoid between the passes, in plain JAX.
    pooled = pooled_sum[:, :, 0] * (1.0 / HW)
    scale = (_channel_conv_sigmoid(pooled, w) + 1.0).astype(x_flat.dtype)[:, :, None]

    # Pass 2: out = x * scale  (the "+ x" is folded into the scale).
    return pl.pallas_call(
        _eca_scale_kernel,
        out_shape=jax.ShapeDtypeStruct((B, C, HW), x_flat.dtype),
        grid_spec=pltpu.PrefetchScalarGridSpec(
            num_scalar_prefetch=0,
            grid=(B, n_hw),
            in_specs=[pl.BlockSpec((1, C, St), lambda b, s: (b, 0, s)),
                      pl.BlockSpec((1, C, 1), lambda b, s: (b, 0, 0))],
            out_specs=pl.BlockSpec((1, C, St), lambda b, s: (b, 0, s)),
        ),
        compiler_params=pltpu.CompilerParams(
            dimension_semantics=("parallel", "parallel"),
            vmem_limit_bytes=_vmem_limit(4 * block_bytes, limit_cap)),
        cost_estimate=pl.CostEstimate(
            flops=B * C * HW, transcendentals=0,
            bytes_accessed=2 * B * C * HW * itemsize),
    )(x_flat, scale)


# ---------------------------------------------------------------------------
# Public entry points.
# ---------------------------------------------------------------------------
def _channel_conv_sigmoid(pooled, w):
    """sigmoid(Conv1d(1, 1, k, pad=(k-1)//2, bias=False) over channels)."""
    w = w.reshape(-1)
    k = w.shape[0]
    pad = (k - 1) // 2
    conv = jax.lax.conv_general_dilated(
        pooled[:, None, :].astype(jnp.float32),
        w[None, None, :].astype(jnp.float32),
        window_strides=(1,), padding=[(pad, pad)],
        dimension_numbers=("NCW", "OIW", "NCW"))[:, 0, :]
    return jax.nn.sigmoid(conv)


def eca_block(x, conv_weight, *, max_block_bytes=None):
    """ECA forward: x * sigmoid(conv1d_k(avgpool(x))) + x.  x: (B, C, H, W)."""
    B, C, H, W = x.shape
    HW = H * W
    x_flat = x.reshape(B, C, HW)
    w = conv_weight.reshape(-1).astype(jnp.float32)

    target, limit_cap = _budgets(max_block_bytes)
    per_sample_bytes = C * HW * x_flat.dtype.itemsize
    if per_sample_bytes <= target:
        out_flat = _eca_fused(x_flat, w, target, limit_cap)
    else:
        out_flat = _eca_spatially_tiled(x_flat, w, target, limit_cap)
    return out_flat.reshape(B, C, H, W)


def eca_ref(x, conv_weight):
    """Pure-JAX reference mirroring the PyTorch forward."""
    pooled = x.mean(axis=(2, 3))
    y = _channel_conv_sigmoid(pooled, conv_weight)[:, :, None, None]
    return x * y + x


if __name__ == "__main__":
    def make_inputs(key, b, c, h, w_sp):
        # kernel_size from the ECABlock __init__ formula (b=1, gamma=2).
        kernel_size = int(abs((math.log(c, 2) + 1) / 2))
        kernel_size = kernel_size if kernel_size % 2 else kernel_size + 1
        kx, kw = jax.random.split(key)
        x = jax.random.normal(kx, (b, c, h, w_sp), dtype=jnp.float32)
        bound = 1.0 / math.sqrt(kernel_size)
        conv_w = jax.random.uniform(kw, (kernel_size,), minval=-bound,
                                    maxval=bound, dtype=jnp.float32)
        return x, conv_w

    key = jax.random.PRNGKey(0)
    k1, k2 = jax.random.split(key)

    # 1) Small C (C % 128 != 0): fused kernel, iota-banded conv path.
    x1, w1 = make_inputs(k1, 2, 16, 16, 16)
    out1 = jax.block_until_ready(eca_block(x1, w1))
    ref1 = eca_ref(x1, w1)
    assert out1.shape == x1.shape and out1.dtype == x1.dtype
    assert jnp.allclose(out1, ref1, atol=1e-5, rtol=1e-5), "mismatch (fused, small C)"

    # 2) Lane-aligned channels (C % 128 == 0): fused kernel, pltpu.roll conv path.
    x2, w2 = make_inputs(k2, 2, 128, 16, 16)
    out2 = jax.block_until_ready(eca_block(x2, w2))
    ref2 = eca_ref(x2, w2)
    assert jnp.allclose(out2, ref2, atol=1e-5, rtol=1e-5), "mismatch (fused, roll)"

    # 3) Force the spatially tiled pool+scale fallback on the small shape.
    out3 = jax.block_until_ready(eca_block(x1, w1, max_block_bytes=8 * 1024))
    assert jnp.allclose(out3, ref1, atol=1e-5, rtol=1e-5), "mismatch (HW-tiled fallback)"

    print("KERNEL_OK")
</pallas_src>

<mosaic_0001>
module attributes {stable_mosaic.version = 11 : i64} {
  func.func @_eca_fused_kernel(%arg0: i32, %arg1: memref<2x16x256xf32, #tpu.memory_space<vmem>>, %arg2: memref<3xf32, #tpu.memory_space<smem>>, %arg3: memref<2x16x256xf32, #tpu.memory_space<vmem>>) attributes {dimension_semantics = [#tpu.dimension_semantics<parallel>], iteration_bounds = array<i64: 1>, scalar_prefetch = 0 : i64, scratch_operands = 0 : i64, tpu.core_type = #tpu.core_type<tc>, window_params = [{transform_indices = @transform_0, window_bounds = array<i64: 2, 16, 256>}, {transform_indices = @transform_1, window_bounds = array<i64: 3>}, {transform_indices = @transform_2, window_bounds = array<i64: 2, 16, 256>}]} {
    %c0 = arith.constant 0 : index
    %c0_0 = arith.constant 0 : index
    %c0_1 = arith.constant 0 : index
    %0 = vector.load %arg1[%c0, %c0_0, %c0_1] : memref<2x16x256xf32, #tpu.memory_space<vmem>>, vector<2x16x256xf32>
    %cst = arith.constant dense<0.000000e+00> : vector<2x16xf32>
    %1 = vector.multi_reduction <add>, %0, %cst [2] : vector<2x16x256xf32> to vector<2x16xf32>
    %cst_2 = arith.constant 3.906250e-03 : f32
    %2 = vector.broadcast %cst_2 : f32 to vector<2x16xf32>
    %3 = arith.mulf %1, %2 : vector<2x16xf32>
    %4 = tpu.iota {dimensions = array<i32: 0>} : vector<16x16xi32>
    %5 = tpu.iota {dimensions = array<i32: 1>} : vector<16x16xi32>
    %6 = arith.subi %4, %5 : vector<16x16xi32>
    %c1_i32 = arith.constant 1 : i32
    %7 = vector.broadcast %c1_i32 : i32 to vector<16x16xi32>
    %8 = arith.addi %6, %7 : vector<16x16xi32>
    %cst_3 = arith.constant 0.000000e+00 : f32
    %9 = vector.broadcast %cst_3 : f32 to vector<16x16xf32>
    %c0_i32 = arith.constant 0 : i32
    %10 = vector.broadcast %c0_i32 : i32 to vector<16x16xi32>
    %11 = arith.cmpi eq, %8, %10 : vector<16x16xi32>
    %c0_4 = arith.constant 0 : index
    %12 = memref.load %arg2[%c0_4] : memref<3xf32, #tpu.memory_space<smem>>
    %cst_5 = arith.constant 0.000000e+00 : f32
    %13 = vector.broadcast %12 : f32 to vector<16x16xf32>
    %14 = vector.broadcast %cst_5 : f32 to vector<16x16xf32>
    %15 = arith.select %11, %13, %14 : vector<16x16xi1>, vector<16x16xf32>
    %16 = arith.addf %9, %15 : vector<16x16xf32>
    %c1_i32_6 = arith.constant 1 : i32
    %17 = vector.broadcast %c1_i32_6 : i32 to vector<16x16xi32>
    %18 = arith.cmpi eq, %8, %17 : vector<16x16xi32>
    %c1 = arith.constant 1 : index
    %19 = memref.load %arg2[%c1] : memref<3xf32, #tpu.memory_space<smem>>
    %cst_7 = arith.constant 0.000000e+00 : f32
    %20 = vector.broadcast %19 : f32 to vector<16x16xf32>
    %21 = vector.broadcast %cst_7 : f32 to vector<16x16xf32>
    %22 = arith.select %18, %20, %21 : vector<16x16xi1>, vector<16x16xf32>
    %23 = arith.addf %16, %22 : vector<16x16xf32>
    %c2_i32 = arith.constant 2 : i32
    %24 = vector.broadcast %c2_i32 : i32 to vector<16x16xi32>
    %25 = arith.cmpi eq, %8, %24 : vector<16x16xi32>
    %c2 = arith.constant 2 : index
    %26 = memref.load %arg2[%c2] : memref<3xf32, #tpu.memory_space<smem>>
    %cst_8 = arith.constant 0.000000e+00 : f32
    %27 = vector.broadcast %26 : f32 to vector<16x16xf32>
    %28 = vector.broadcast %cst_8 : f32 to vector<16x16xf32>
    %29 = arith.select %25, %27, %28 : vector<16x16xi1>, vector<16x16xf32>
    %30 = arith.addf %23, %29 : vector<16x16xf32>
    %31 = vector.shape_cast %3 : vector<2x16xf32> to vector<2x16x1xf32>
    %32 = vector.shape_cast %30 : vector<16x16xf32> to vector<1x16x16xf32>
    %33 = vector.broadcast %31 : vector<2x16x1xf32> to vector<2x16x16xf32>
    %34 = vector.broadcast %32 : vector<1x16x16xf32> to vector<2x16x16xf32>
    %35 = arith.mulf %33, %34 : vector<2x16x16xf32>
    %cst_9 = arith.constant dense<0.000000e+00> : vector<2x16xf32>
    %36 = vector.multi_reduction <add>, %35, %cst_9 [1] : vector<2x16x16xf32> to vector<2x16xf32>
    %37 = arith.negf %36 : vector<2x16xf32>
    %38 = math.exp %37 : vector<2x16xf32>
    %cst_10 = arith.constant 1.000000e+00 : f32
    %39 = vector.broadcast %cst_10 : f32 to vector<2x16xf32>
    %40 = arith.addf %39, %38 : vector<2x16xf32>
    %41 = arith.divf %39, %40 : vector<2x16xf32>
    %cst_11 = arith.constant 1.000000e+00 : f32
    %42 = vector.broadcast %cst_11 : f32 to vector<2x16xf32>
    %43 = arith.addf %41, %42 : vector<2x16xf32>
    %44 = vector.shape_cast %43 : vector<2x16xf32> to vector<2x16x1xf32>
    %c0_12 = arith.constant 0 : index
    %c0_13 = arith.constant 0 : index
    %c0_14 = arith.constant 0 : index
    %45 = vector.load %arg1[%c0_12, %c0_13, %c0_14] : memref<2x16x256xf32, #tpu.memory_space<vmem>>, vector<2x16x256xf32>
    %46 = vector.broadcast %44 : vector<2x16x1xf32> to vector<2x16x256xf32>
    %47 = arith.mulf %45, %46 : vector<2x16x256xf32>
    %c0_15 = arith.constant 0 : index
    %c0_16 = arith.constant 0 : index
    %c0_17 = arith.constant 0 : index
    %48 = vector.load %arg3[%c0_15, %c0_16, %c0_17] : memref<2x16x256xf32, #tpu.memory_space<vmem>>, vector<2x16x256xf32>
    tpu.vector_store %arg3[%c0_15, %c0_16, %c0_17], %47 {strides = array<i32>} : memref<2x16x256xf32, #tpu.memory_space<vmem>>, vector<2x16x256xf32>,
    return
  }
  func.func @transform_0(%arg0: i32) -> (i32, i32, i32) {
    %c0_i32 = arith.constant 0 : i32
    %c0_i32_0 = arith.constant 0 : i32
    %c0_i32_1 = arith.constant 0 : i32
    return %arg0, %c0_i32, %c0_i32_0 : i32, i32, i32
  }
  func.func @transform_1(%arg0: i32) -> i32 {
    %c0_i32 = arith.constant 0 : i32
    %c0_i32_0 = arith.constant 0 : i32
    return %c0_i32 : i32
  }
  func.func @transform_2(%arg0: i32) -> (i32, i32, i32) {
    %c0_i32 = arith.constant 0 : i32
    %c0_i32_0 = arith.constant 0 : i32
    %c0_i32_1 = arith.constant 0 : i32
    return %arg0, %c0_i32, %c0_i32_0 : i32, i32, i32
  }
}

</mosaic_0001>

<llo_original>
// kernel: tpu_custom_call.1
$region0: #{tpu_custom_call.1}
  #allocation0 [shape = 'u32[]', space=smem, size = 0x4, offset = 0x4, fixed_abs, tag = 'smem constant byte address 0x4 - core index']
  #allocation1 [shape = 'u32[72,128]{1,0:T(1,128)}', space=vmem, size = 0x9000, scoped, tag = 'internal scratch']
  %s0 = inlined_call_operand.hbm [shape: f32[2,16,256], index: 0, kind: input, shape index: {}]
  %s1 = inlined_call_operand.hbm [shape: f32[3], index: 1, kind: input, shape index: {}]
  %s2 = inlined_call_operand.hbm [shape: f32[2,16,256], index: 2, kind: output, shape index: {}]
  %s3 = sld [smem:[#allocation0]]
  $region26: #{tpu_custom_call.1} parent=0
    _
  %s5 = ssub.s32 1, %s3
  %s6 = scalar_select 0, %s5, %s3
  $region1: #{tpu_custom_call.1} parent=0
    #allocation2 [shape = 'u8[32768]{0}', space=vmem, size = 0x8000, scoped, tag = 'input window, operand 0, single buffered']
    #allocation3 [shape = 's32[1]{0}', space=sflag, size = 0x4, scoped, tag = 'scoped memory for tpu_custom_call.1']
    #allocation4 [shape = 's32[1]{0}', space=sflag, size = 0x4, scoped, tag = 'scoped memory for tpu_custom_call.1']
    #allocation5 [shape = 's32[1]{0}', space=sflag, size = 0x4, scoped, tag = 'scoped memory for tpu_custom_call.1']
    #allocation6 [shape = 'u8[512]{0}', space=smem, size = 0x200, scoped, tag = 'input window, operand 1, single buffered']
    #allocation7 [shape = 'u8[32768]{0}', space=vmem, size = 0x8000, scoped, tag = 'output window, operand 0, single buffered']
    %7 = vsyncpa [#allocation3], 0
    %8 = vsyncpa [#allocation5], 0
    %9 = vsyncpa [#allocation4], 0
    // Predicated region
    $region2: #{tpu_custom_call.1} parent=1 // pred_check
      _
    $region3: #{tpu_custom_call.1} parent=1 // pred_check_branch
      %11 = sbr.rel (0) target = $region5
    $region4: #{tpu_custom_call.1} parent=1 // pred_region
      %13 = vsyncadd [#allocation3], 0
      %s14 = sshll.u32 %s0, 4
      %s15 = int_to_ptr.hbm [resolvable:$true] %s14
      %s16 = sshll.u32 [#allocation2], 4
      %s17 = int_to_ptr.vmem [resolvable:$true] %s16
      %22 = dma.hbm_to_vmem [thread:$0]  %s15, 1024, %s17, [#allocation3], 256, 256, 16
    $region5: #{tpu_custom_call.1} parent=1 // pred_fallthru
      _
    // Predicated region
    $region6: #{tpu_custom_call.1} parent=1 // pred_check
      _
    $region7: #{tpu_custom_call.1} parent=1 // pred_check_branch
      %24 = sbr.rel (0) target = $region9
    $region8: #{tpu_custom_call.1} parent=1 // pred_region
      %26 = vsyncadd [#allocation5], 0
      %s28 = sshll.u32 %s1, 4
      %s29 = int_to_ptr.hbm [resolvable:$true] %s28
      %31 = dma.hbm_to_smem %s29, 16, [#allocation6], [#allocation5]
    $region9: #{tpu_custom_call.1} parent=1 // pred_fallthru
      _
    // Predicated region
    $region10: #{tpu_custom_call.1} parent=1 // pred_check
      _
    $region11: #{tpu_custom_call.1} parent=1 // pred_check_branch
      %33 = sbr.rel (0) target = $region13
    $region12: #{tpu_custom_call.1} parent=1 // pred_region
      %35 = dma.done [#allocation3], 1024
    $region13: #{tpu_custom_call.1} parent=1 // pred_fallthru
      _
    // Predicated region
    $region14: #{tpu_custom_call.1} parent=1 // pred_check
      _
    $region15: #{tpu_custom_call.1} parent=1 // pred_check_branch
      %37 = sbr.rel (0) target = $region17
    $region16: #{tpu_custom_call.1} parent=1 // pred_region
      %39 = dma.done [#allocation5], 16
    $region17: #{tpu_custom_call.1} parent=1 // pred_fallthru
      _
    %40 = sfence
    %v41 = vld [vmem:[#allocation2] sm:$0xff]
    %v42 = vld [vmem:[#allocation2 + $0x8] sm:$0xff]
    %v43 = vld [vmem:[#allocation2 + $0x10] sm:$0xff]
    %v44 = vld [vmem:[#allocation2 + $0x18] sm:$0xff]
    %v45 = vld [vmem:[#allocation2 + $0x20] sm:$0xff]
    %v46 = vld [vmem:[#allocation2 + $0x28] sm:$0xff]
    %v47 = vld [vmem:[#allocation2 + $0x30] sm:$0xff]
    %v48 = vld [vmem:[#allocation2 + $0x38] sm:$0xff]
    %v49 = vadd.f32 %v41, %v42
    %50 = vadd.xlane.f32.xlu0 %v49
    %v51 = vpop.xlane.xlu0 %50
    %v52 = vadd.f32 %v43, %v44
    %53 = vadd.xlane.f32.xlu0 %v52
    %v54 = vpop.xlane.xlu0 %53
    %v55 = vadd.f32 %v45, %v46
    %56 = vadd.xlane.f32.xlu0 %v55
    %v57 = vpop.xlane.xlu0 %56
    %v58 = vadd.f32 %v47, %v48
    %59 = vadd.xlane.f32.xlu0 %v58
    %v60 = vpop.xlane.xlu0 %59
    %v61 = vmul.f32 %v51, 0.00390625
    %v62 = vmul.f32 %v54, 0.00390625
    %v63 = vmul.f32 %v57, 0.00390625
    %v64 = vmul.f32 %v60, 0.00390625
    %v65 = vlaneseq
    %v66 = vshrl.u32 %v65, 7
    %v67 = vadd.s32 %v66, 8
    %v68 = vlaneseq
    %v69 = vand.u32 %v68, 127
    %v70 = vsub.s32 %v66, %v69
    %v71 = vsub.s32 %v67, %v69
    %v72 = vadd.s32 %v70, 1
    %v73 = vadd.s32 %v71, 1
    %vm74 = vcmp.eq.s32.totalorder %v72, 0
    %vm75 = vcmp.eq.s32.totalorder %v73, 0
    %s76 = sld [smem:[#allocation6]]
    %v77 = vstv %s76
    %v78 = vsel %vm74, %v77, 0.0
    %v79 = vsel %vm75, %v77, 0.0
    %v80 = vadd.f32 %v78, 0.0
    %v81 = vadd.f32 %v79, 0.0
    %vm82 = vcmp.eq.s32.totalorder %v72, 1
    %vm83 = vcmp.eq.s32.totalorder %v73, 1
    %s84 = sld [smem:[#allocation6 + $0x1]]
    %v85 = vstv %s84
    %v86 = vsel %vm82, %v85, 0.0
    %v87 = vsel %vm83, %v85, 0.0
    %v88 = vadd.f32 %v80, %v86
    %v89 = vadd.f32 %v81, %v87
    %vm90 = vcmp.eq.s32.totalorder %v72, 2
    %vm91 = vcmp.eq.s32.totalorder %v73, 2
    %s92 = sld [smem:[#allocation6 + $0x2]]
    %v93 = vstv %s92
    %v94 = vsel %vm90, %v93, 0.0
    %v95 = vsel %vm91, %v93, 0.0
    %v96 = vadd.f32 %v88, %v94
    %v97 = vadd.f32 %v89, %v95
    %v98 = vmul.f32 %v61, %v96
    %v99 = vmul.f32 %v62, %v97
    %v100 = vmul.f32 %v63, %v96
    %v101 = vmul.f32 %v64, %v97
    %vm102 = vcmask 130048
    %v103 = vsel %vm102, %v98, 0.0
    %v104 = vsel %vm102, %v99, 0.0
    %v105 = vadd.f32 %v103, %v104
    %v106 = vrot.slane %v105, 4
    %v107 = vadd.f32 %v105, %v106
    %v108 = vrot.slane %v107, 2
    %v109 = vadd.f32 %v107, %v108
    %v110 = vrot.slane %v109, 1
    %v111 = vadd.f32 %v109, %v110
    %v112 = vsel %vm102, %v100, 0.0
    %v113 = vsel %vm102, %v101, 0.0
    %v114 = vadd.f32 %v112, %v113
    %v115 = vrot.slane %v114, 4
    %v116 = vadd.f32 %v114, %v115
    %v117 = vrot.slane %v116, 2
    %v118 = vadd.f32 %v116, %v117
    %v119 = vrot.slane %v118, 1
    %v120 = vadd.f32 %v118, %v119
    %v121 = vxor.u32 %v111, 2147483648
    %v122 = vxor.u32 %v120, 2147483648
    %v123 = vmul.f32 %v121, 1.442695
    %v124 = vpow.pop %v123
    %v125 = vmul.f32 %v122, 1.442695
    %v126 = vpow.pop %v125
    %v127 = vadd.f32 %v124, 1.0
    %v128 = vadd.f32 %v126, 1.0
    %v129 = vrcp.pop %v127
    %v130 = vmul.f32 %v127, %v129
    %v131 = vsub.f32 1.0, %v130
    %v132 = vmul.f32 %v129, %v131
    %v133 = vadd.f32 %v129, %v132
    %vm134 = vweird.f32 %v127
    %vm135 = vweird.f32 %v129
    %vm136 = vmor %vm134, %vm135
    %v137 = vsel %vm136, %v129, %v133
    %v138 = vand.u32 2147483647, %v127
    %vm139 = vcmp.eq.f32.partialorder %v138, 8.507059e+37
    %v140 = vand.u32 %v127, 2147483648
    %v141 = vor.u32 1.1754944e-38, %v140
    %v142 = vsel %vm139, %v141, %v137
    %v143 = vmul.f32 1.0, %v142
    %v144 = vrcp.pop %v128
    %v145 = vmul.f32 %v128, %v144
    %v146 = vsub.f32 1.0, %v145
    %v147 = vmul.f32 %v144, %v146
    %v148 = vadd.f32 %v144, %v147
    %vm149 = vweird.f32 %v128
    %vm150 = vweird.f32 %v144
    %vm151 = vmor %vm149, %vm150
    %v152 = vsel %vm151, %v144, %v148
    %v153 = vand.u32 2147483647, %v128
    %vm154 = vcmp.eq.f32.partialorder %v153, 8.507059e+37
    %v155 = vand.u32 %v128, 2147483648
    %v156 = vor.u32 1.1754944e-38, %v155
    %v157 = vsel %vm154, %v156, %v152
    %v158 = vmul.f32 1.0, %v157
    %v159 = vadd.f32 %v143, 1.0
    %v160 = vadd.f32 %v158, 1.0
    %v161 = vlaneseq
    %v162 = vshrl.u32 %v161, 7
    %164 = vset.pattern.permute.xlu0 %v162
    %165 = vperm.xlu0 %164, %v159
    %v166 = vpop.permute.xlu0 %165
    %v167 = vlaneseq
    %v168 = vshrl.u32 %v167, 7
    %v169 = vadd.s32 %v168, 8
    %170 = vset.pattern.permute.xlu0 %v169
    %171 = vperm.xlu0 %170, %v159
    %v172 = vpop.permute.xlu0 %171
    %v173 = vlaneseq
    %v174 = vshrl.u32 %v173, 7
    %176 = vset.pattern.permute.xlu0 %v174
    %177 = vperm.xlu0 %176, %v160
    %v178 = vpop.permute.xlu0 %177
    %v179 = vlaneseq
    %v180 = vshrl.u32 %v179, 7
    %v181 = vadd.s32 %v180, 8
    %182 = vset.pattern.permute.xlu0 %v181
    %183 = vperm.xlu0 %182, %v160
    %v184 = vpop.permute.xlu0 %183
    %v185 = vmul.f32 %v41, %v166
    %v186 = vmul.f32 %v42, %v166
    %v187 = vmul.f32 %v43, %v172
    %v188 = vmul.f32 %v44, %v172
    %v189 = vmul.f32 %v45, %v178
    %v190 = vmul.f32 %v46, %v178
    %v191 = vmul.f32 %v47, %v184
    %v192 = vmul.f32 %v48, %v184
    %193 = vst [vmem:[#allocation7] sm:$0xff] %v185
    %194 = vst [vmem:[#allocation7 + $0x8] sm:$0xff] %v186
    %195 = vst [vmem:[#allocation7 + $0x10] sm:$0xff] %v187
    %196 = vst [vmem:[#allocation7 + $0x18] sm:$0xff] %v188
    %197 = vst [vmem:[#allocation7 + $0x20] sm:$0xff] %v189
    %198 = vst [vmem:[#allocation7 + $0x28] sm:$0xff] %v190
    %199 = vst [vmem:[#allocation7 + $0x30] sm:$0xff] %v191
    %200 = vst [vmem:[#allocation7 + $0x38] sm:$0xff] %v192
    // Predicated region
    $region18: #{tpu_custom_call.1} parent=1 // pred_check
      _
    $region19: #{tpu_custom_call.1} parent=1 // pred_check_branch
      %202 = sbr.rel (0) target = $region21
    $region20: #{tpu_custom_call.1} parent=1 // pred_region
      %204 = vsyncadd [#allocation4], 0
      %s205 = sshll.u32 [#allocation7], 4
      %s206 = int_to_ptr.vmem [resolvable:$true] %s205
      %s207 = sshll.u32 %s2, 4
      %s208 = int_to_ptr.hbm [resolvable:$true] %s207
      %213 = dma.vmem_to_hbm [thread:$0]  %s206, 1024, %s208, [#allocation4], 256, 256, 16
    $region21: #{tpu_custom_call.1} parent=1 // pred_fallthru
      _
    // Predicated region
    $region22: #{tpu_custom_call.1} parent=1 // pred_check
      _
    $region23: #{tpu_custom_call.1} parent=1 // pred_check_branch
      %215 = sbr.rel (0) target = $region25
    $region24: #{tpu_custom_call.1} parent=1 // pred_region
      %217 = dma.done [#allocation4], 1024
    $region25: #{tpu_custom_call.1} parent=1 // pred_fallthru
      _
    %218 = vsyncpa [#allocation3], 1
    %219 = vsyncpa [#allocation4], 1
    %220 = vsyncpa [#allocation5], 1

</llo_original>
